<compile_context>
chip_gen: v7x
topology: tpu7x:2x2x1
jax: 0.10.0
libtpu: 0.0.40
codegen_flags: <defaults>
</compile_context>

<pallas_src>
import jax
import jax.numpy as jnp
from jax.experimental import pallas as pl
from jax.experimental.pallas import tpu as pltpu


def _round_up(x, m):
    return ((x + m - 1) // m) * m


def _packed_kernel(x_ref, w_ref, b_ref, o_ref):
    # x_ref: (tbb, 128, F) native dtype (streamed); w_ref: (1, F) f32 resident;
    # b_ref: (1,) f32 in SMEM; o_ref: (tbb, 1, 128) f32 (lane-dense rows).
    x = x_ref[...].astype(jnp.float32)
    w = w_ref[...]                                   # (1, F), broadcasts
    b = b_ref[0]
    # VPU multiply + XLU cross-lane reduce; avoids a 1-of-256-columns MXU matmul.
    z = jnp.sum(x * w, axis=-1) + b                  # (tbb, 128) lane-major
    y = jax.nn.sigmoid(z)
    o_ref[...] = y.reshape(o_ref.shape).astype(o_ref.dtype)


def _rowcol_kernel(x_ref, w_ref, b_ref, o_ref):
    # Fallback (B % 128 != 0): x_ref (tb, F), o_ref (tb, 1) masked-column store.
    x = x_ref[...].astype(jnp.float32)
    w = w_ref[...]                                   # (1, F)
    b = b_ref[0]
    z = jnp.sum(x * w, axis=-1, keepdims=True) + b   # (tb, 1)
    o_ref[...] = jax.nn.sigmoid(z).astype(o_ref.dtype)


def logistic_forward(x, weight, bias, *, target_tile_bytes=12 << 20):
    """x: [B, F] (any float dtype); weight: [1, F] (torch Linear layout); bias: [1]."""
    B, F = x.shape
    w_row = jnp.asarray(weight, jnp.float32).reshape(1, F)
    b_vec = jnp.asarray(bias, jnp.float32).reshape(1)

    itemsize = x.dtype.itemsize
    padded_f = _round_up(F, 128)                 # lane padding in VMEM
    row_bytes = padded_f * itemsize              # padded VMEM bytes per sample
    w_bytes = 8 * padded_f * 4                   # (1,F) pads to 8 sublanes

    cost = pl.CostEstimate(
        flops=2 * B * F,
        transcendentals=3 * B,                   # sigmoid ~ exp + add + recip
        bytes_accessed=B * F * itemsize + 4 * (F + B + 1),
    )

    if B % 128 == 0:
        # ---- Lane-dense path: pack 128 samples per block row-group. ----
        m = B // 128                             # number of 128-sample groups
        group_bytes = 128 * row_bytes            # padded bytes per group
        tbb = max(1, target_tile_bytes // group_bytes)
        if m >= 2:
            tbb = min(tbb, pl.cdiv(m, 2))        # guarantee >= 2 grid tiles (v7x dual-TC)
        tbb = min(tbb, m)
        grid = (pl.cdiv(m, tbb),)

        x3 = x.reshape(m, 128, F)                # free, row-major

        x_tile = tbb * group_bytes
        o_tile = tbb * 8 * 128 * 4               # (tbb,1,128) f32, sublane-padded
        need = 2 * (x_tile + o_tile + w_bytes) + (4 << 20)
        vmem_limit = max(32 << 20, _round_up(need, 1 << 20))

        out3 = pl.pallas_call(
            _packed_kernel,
            out_shape=jax.ShapeDtypeStruct((m, 1, 128), jnp.float32),
            grid_spec=pltpu.PrefetchScalarGridSpec(
                num_scalar_prefetch=0,
                grid=grid,
                in_specs=[
                    # Streamed batch tiles of x (double-buffered, native dtype).
                    pl.BlockSpec((tbb, 128, F), lambda i: (i, 0, 0)),
                    # Weight row: constant block index => resident, DMA'd once.
                    pl.BlockSpec((1, F), lambda i: (0, 0)),
                    # Bias: whole (1,) array in SMEM, read as a scalar.
                    pl.BlockSpec(memory_space=pltpu.MemorySpace.SMEM),
                ],
                out_specs=pl.BlockSpec((tbb, 1, 128), lambda i: (i, 0, 0)),
            ),
            compiler_params=pltpu.CompilerParams(
                dimension_semantics=("parallel",),
                vmem_limit_bytes=vmem_limit,
            ),
            cost_estimate=cost,
        )(x3, w_row, b_vec)
        return out3.reshape(B, 1)

    # ---- Fallback path (B % 128 != 0): masked (tb, 1) column output. ----
    rows_per_tile = max(8, (target_tile_bytes // row_bytes) // 8 * 8)
    if B <= 8:
        tb = B
    else:
        tb = min(rows_per_tile, max(8, (B // 2) // 8 * 8))  # >= 2 grid tiles
    grid = (pl.cdiv(B, tb),)

    tb_pad = _round_up(tb, 8)
    x_tile = tb_pad * row_bytes
    o_tile = tb_pad * 128 * 4                    # (tb,1) f32 pads lane dim to 128
    need = 2 * (x_tile + o_tile + w_bytes) + (4 << 20)
    vmem_limit = max(32 << 20, _round_up(need, 1 << 20))

    return pl.pallas_call(
        _rowcol_kernel,
        out_shape=jax.ShapeDtypeStruct((B, 1), jnp.float32),
        grid_spec=pltpu.PrefetchScalarGridSpec(
            num_scalar_prefetch=0,
            grid=grid,
            in_specs=[
                pl.BlockSpec((tb, F), lambda i: (i, 0)),
                pl.BlockSpec((1, F), lambda i: (0, 0)),
                pl.BlockSpec(memory_space=pltpu.MemorySpace.SMEM),
            ],
            out_specs=pl.BlockSpec((tb, 1), lambda i: (i, 0)),
        ),
        compiler_params=pltpu.CompilerParams(
            dimension_semantics=("parallel",),
            vmem_limit_bytes=vmem_limit,
        ),
        cost_estimate=cost,
    )(x, w_row, b_vec)


if __name__ == "__main__":
    key = jax.random.PRNGKey(0)
    kx, kw, kb = jax.random.split(key, 3)

    batch, n_features = 256, 32
    x = jax.random.normal(kx, (batch, n_features), dtype=jnp.float32)
    # Deterministic parameter init (mimics torch Linear uniform init scale).
    bound = 1.0 / (n_features ** 0.5)
    weight = jax.random.uniform(kw, (1, n_features), jnp.float32, -bound, bound)
    bias = jax.random.uniform(kb, (1,), jnp.float32, -bound, bound)

    y_ref = jax.nn.sigmoid(x @ weight.T + bias)

    # Main lane-dense path: B=256 -> 2 grid tiles of 128 samples each.
    y = logistic_forward(x, weight, bias)
    jax.block_until_ready(y)
    assert y.shape == (batch, 1)
    assert jnp.allclose(y, y_ref, atol=1e-5, rtol=1e-5)

    # Native-dtype streaming: bf16 activations in HBM, f32 math in-kernel.
    x_bf16 = x.astype(jnp.bfloat16)
    y_bf16 = logistic_forward(x_bf16, weight, bias)
    jax.block_until_ready(y_bf16)
    y_bf16_ref = jax.nn.sigmoid(x_bf16.astype(jnp.float32) @ weight.T + bias)
    assert jnp.allclose(y_bf16, y_bf16_ref, atol=1e-4, rtol=1e-4)

    # Fallback path: B % 128 != 0 (masked-column output, still tiled).
    x_odd = x[:200]
    y_odd = logistic_forward(x_odd, weight, bias)
    jax.block_until_ready(y_odd)
    assert jnp.allclose(y_odd, y_ref[:200], atol=1e-5, rtol=1e-5)

    print("KERNEL_OK")
</pallas_src>

<mosaic_0001>
module attributes {stable_mosaic.version = 11 : i64} {
  func.func @_packed_kernel(%arg0: i32, %arg1: memref<1x128x32xf32, #tpu.memory_space<vmem>>, %arg2: memref<1x32xf32, #tpu.memory_space<vmem>>, %arg3: memref<1xf32, #tpu.memory_space<smem>>, %arg4: memref<1x1x128xf32, #tpu.memory_space<vmem>>) attributes {dimension_semantics = [#tpu.dimension_semantics<parallel>], iteration_bounds = array<i64: 2>, scalar_prefetch = 0 : i64, scratch_operands = 0 : i64, tpu.core_type = #tpu.core_type<tc>, window_params = [{transform_indices = @transform_0, window_bounds = array<i64: 1, 128, 32>}, {pipeline_mode = #tpu.pipeline_mode<synchronous>, transform_indices = @transform_1, window_bounds = array<i64: 1, 32>}, {transform_indices = @transform_2, window_bounds = array<i64: 1>}, {transform_indices = @transform_3, window_bounds = array<i64: 1, 1, 128>}]} {
    %c0 = arith.constant 0 : index
    %c0_0 = arith.constant 0 : index
    %c0_1 = arith.constant 0 : index
    %0 = vector.load %arg1[%c0, %c0_0, %c0_1] : memref<1x128x32xf32, #tpu.memory_space<vmem>>, vector<1x128x32xf32>
    %c0_2 = arith.constant 0 : index
    %c0_3 = arith.constant 0 : index
    %1 = vector.load %arg2[%c0_2, %c0_3] : memref<1x32xf32, #tpu.memory_space<vmem>>, vector<1x32xf32>
    %c0_4 = arith.constant 0 : index
    %2 = memref.load %arg3[%c0_4] : memref<1xf32, #tpu.memory_space<smem>>
    %3 = vector.shape_cast %1 : vector<1x32xf32> to vector<1x1x32xf32>
    %4 = vector.broadcast %3 : vector<1x1x32xf32> to vector<1x128x32xf32>
    %5 = arith.mulf %0, %4 : vector<1x128x32xf32>
    %cst = arith.constant dense<0.000000e+00> : vector<1x128xf32>
    %6 = vector.multi_reduction <add>, %5, %cst [2] : vector<1x128x32xf32> to vector<1x128xf32>
    %7 = vector.broadcast %2 : f32 to vector<1x128xf32>
    %8 = arith.addf %6, %7 : vector<1x128xf32>
    %9 = arith.negf %8 : vector<1x128xf32>
    %10 = math.exp %9 : vector<1x128xf32>
    %cst_5 = arith.constant 1.000000e+00 : f32
    %11 = vector.broadcast %cst_5 : f32 to vector<1x128xf32>
    %12 = arith.addf %11, %10 : vector<1x128xf32>
    %13 = arith.divf %11, %12 : vector<1x128xf32>
    %14 = vector.shape_cast %13 : vector<1x128xf32> to vector<1x1x128xf32>
    %c0_6 = arith.constant 0 : index
    %c0_7 = arith.constant 0 : index
    %c0_8 = arith.constant 0 : index
    %15 = vector.load %arg4[%c0_6, %c0_7, %c0_8] : memref<1x1x128xf32, #tpu.memory_space<vmem>>, vector<1x1x128xf32>
    tpu.vector_store %arg4[%c0_6, %c0_7, %c0_8], %14 {strides = array<i32>} : memref<1x1x128xf32, #tpu.memory_space<vmem>>, vector<1x1x128xf32>,
    return
  }
  func.func @transform_0(%arg0: i32) -> (i32, i32, i32) {
    %c0_i32 = arith.constant 0 : i32
    %c0_i32_0 = arith.constant 0 : i32
    %c0_i32_1 = arith.constant 0 : i32
    return %arg0, %c0_i32, %c0_i32_0 : i32, i32, i32
  }
  func.func @transform_1(%arg0: i32) -> (i32, i32) {
    %c0_i32 = arith.constant 0 : i32
    %c0_i32_0 = arith.constant 0 : i32
    %c0_i32_1 = arith.constant 0 : i32
    return %c0_i32, %c0_i32_0 : i32, i32
  }
  func.func @transform_2(%arg0: i32) -> i32 {
    %c0_i32 = arith.constant 0 : i32
    %c0_i32_0 = arith.constant 0 : i32
    return %c0_i32 : i32
  }
  func.func @transform_3(%arg0: i32) -> (i32, i32, i32) {
    %c0_i32 = arith.constant 0 : i32
    %c0_i32_0 = arith.constant 0 : i32
    %c0_i32_1 = arith.constant 0 : i32
    return %arg0, %c0_i32, %c0_i32_0 : i32, i32, i32
  }
}

</mosaic_0001>

<llo_original>
// kernel: tpu_custom_call.1
$region0: #{tpu_custom_call.1}
  #allocation0 [shape = 'u32[]', space=smem, size = 0x4, offset = 0x4, fixed_abs, tag = 'smem constant byte address 0x4 - core index']
  #allocation1 [shape = 'u32[144,128]{1,0:T(1,128)}', space=vmem, size = 0x12000, scoped, tag = 'internal scratch']
  #allocation2 [shape = 'f32[1]{0:T(128)S(6)}', space=smem, size = 0x200, scoped, tag = 'scoped memory for tpu_custom_call.1']
  %s0 = inlined_call_operand.vmem [shape: f32[2,128,32], index: 0, kind: input, shape index: {}]
  %s1 = inlined_call_operand.vmem [shape: f32[1,32], index: 1, kind: input, shape index: {}]
  %s2 = inlined_call_operand.<no memory space> [shape: f32[1], index: 2, kind: input, shape index: {}]
  %s3 = inlined_call_operand.hbm [shape: f32[2,1,128], index: 3, kind: output, shape index: {}]
  %s4 = sld [smem:[#allocation0]]
  $region45: #{tpu_custom_call.1} parent=0
    _
  %s6 = ssub.s32 1, %s4
  %s7 = scalar_select 0, %s6, %s4
  %8 = sst [smem:[#allocation2]] %s2
  $region1: #{tpu_custom_call.1} parent=0
    #allocation3 [shape = 'u8[1024]{0}', space=vmem, size = 0x400, scoped, tag = 'output window, operand 0']
    #allocation4 [shape = 's32[2]{0}', space=sflag, size = 0x8, scoped, tag = 'scoped memory for tpu_custom_call.1']
    %9 = vsyncpa [#allocation4], 0
    %s10 = scalar_lea.sflag [#allocation4], 1
    %11 = vsyncpa %s10, 0
    loop: start=0, step=1, limit=4
    $region2: #{tpu_custom_call.1} parent=1 // loop_pre_header
      _
    $region3: #{tpu_custom_call.1} parent=1 // loop_header
      %s13 = sphi 0, %s17
      %p14 = scmp.ge.s32.totalorder %s13, 4
      %s23 = sphi 0, %s25
      %s26 = sphi 0, %s23
      %s27 = sphi 0, %s26
      %s43 = sphi 0, %s27
      %s47 = sphi 0, %s47
      %s49 = sphi 0, %s47
      %s50 = sphi 0, %s49
      %s64 = sphi 0, %s50
      %s68 = sphi 0, %s68
      %s70 = sphi 0, %s68
      %s71 = sphi 0, %s70
      %s85 = sphi 0, %s71
      %s91 = sphi 0, %s93
      %s94 = sphi 0, %s91
      %s95 = sphi 0, %s94
      %s111 = sphi 0, %s95
    $region4: #{tpu_custom_call.1} parent=1 // loop_header_branch
      %16 = sbr.rel (%p14) target = $region8
    $region5: #{tpu_custom_call.1} parent=1 // loop_body
      %s18 = ssub.s32 %s13, 1
      %s19 = ssub.s32 %s13, 2
      %s20 = sadd.s32 %s13, 1
      %s21 = ssub.s32 %s13, %s20
      %p22 = scmp.eq.s32.totalorder %s21, 0
      %s24 = sadd.s32 %s23, 1
      %s25 = scalar_select %p22, %s23, %s24
      %p28 = pneg %p22
      %p29 = scmp.eq.s32.totalorder %s13, 1
      %p30 = por %p28, %p29
      %p31 = scmp.ne.s32.totalorder %s23, %s26
      %p32 = scmp.eq.s32.totalorder %s13, 0
      %p33 = por %p31, %p32
      %p34 = scmp.ne.s32.totalorder %s23, %s26
      %p35 = scmp.eq.s32.totalorder %s18, 1
      %p36 = por %p34, %p35
      %p37 = scmp.ne.s32.totalorder %s26, %s27
      %p38 = scmp.eq.s32.totalorder %s18, 0
      %p39 = por %p37, %p38
      %p40 = scmp.ne.s32.totalorder %s26, %s27
      %p41 = scmp.eq.s32.totalorder %s19, 1
      %p42 = por %p40, %p41
      %p44 = scmp.ne.s32.totalorder %s27, %s43
      %p45 = scmp.eq.s32.totalorder %s19, 0
      %p46 = por %p44, %p45
      %s48 = sadd.s32 %s47, 1
      %p51 = scmp.eq.s32.totalorder %s13, 1
      %p52 = scmp.ne.s32.totalorder %s47, %s49
      %p53 = scmp.eq.s32.totalorder %s13, 0
      %p54 = por %p52, %p53
      %p55 = scmp.ne.s32.totalorder %s47, %s49
      %p56 = scmp.eq.s32.totalorder %s18, 1
      %p57 = por %p55, %p56
      %p58 = scmp.ne.s32.totalorder %s49, %s50
      %p59 = scmp.eq.s32.totalorder %s18, 0
      %p60 = por %p58, %p59
      %p61 = scmp.ne.s32.totalorder %s49, %s50
      %p62 = scmp.eq.s32.totalorder %s19, 1
      %p63 = por %p61, %p62
      %p65 = scmp.ne.s32.totalorder %s50, %s64
      %p66 = scmp.eq.s32.totalorder %s19, 0
      %p67 = por %p65, %p66
      %s69 = sadd.s32 %s68, 1
      %p72 = scmp.eq.s32.totalorder %s13, 1
      %p73 = scmp.ne.s32.totalorder %s68, %s70
      %p74 = scmp.eq.s32.totalorder %s13, 0
      %p75 = por %p73, %p74
      %p76 = scmp.ne.s32.totalorder %s68, %s70
      %p77 = scmp.eq.s32.totalorder %s18, 1
      %p78 = por %p76, %p77
      %p79 = scmp.ne.s32.totalorder %s70, %s71
      %p80 = scmp.eq.s32.totalorder %s18, 0
      %p81 = por %p79, %p80
      %p82 = scmp.ne.s32.totalorder %s70, %s71
      %p83 = scmp.eq.s32.totalorder %s19, 1
      %p84 = por %p82, %p83
      %p86 = scmp.ne.s32.totalorder %s71, %s85
      %p87 = scmp.eq.s32.totalorder %s19, 0
      %p88 = por %p86, %p87
      %s89 = ssub.s32 %s13, %s20
      %p90 = scmp.eq.s32.totalorder %s89, 0
      %s92 = sadd.s32 %s91, 1
      %s93 = scalar_select %p90, %s91, %s92
      %p96 = pneg %p90
      %p97 = scmp.eq.s32.totalorder %s13, 1
      %p98 = por %p96, %p97
      %p99 = scmp.ne.s32.totalorder %s91, %s94
      %p100 = scmp.eq.s32.totalorder %s13, 0
      %p101 = por %p99, %p100
      %p102 = scmp.ne.s32.totalorder %s91, %s94
      %p103 = scmp.eq.s32.totalorder %s18, 1
      %p104 = por %p102, %p103
      %p105 = scmp.ne.s32.totalorder %s94, %s95
      %p106 = scmp.eq.s32.totalorder %s18, 0
      %p107 = por %p105, %p106
      %p108 = scmp.ne.s32.totalorder %s94, %s95
      %p109 = scmp.eq.s32.totalorder %s19, 1
      %p110 = por %p108, %p109
      %p112 = scmp.ne.s32.totalorder %s95, %s111
      %p113 = scmp.eq.s32.totalorder %s19, 0
      %p114 = por %p112, %p113
      %p115 = scmp.le.s32.totalorder 1, %s13
      %p116 = scmp.lt.s32.totalorder %s13, 3
      %p117 = pnand %p115, %p116
      %p118 = pneg %p117
      // Predicated region
      $region9: #{tpu_custom_call.1} parent=5 // pred_check
        _
      $region10: #{tpu_custom_call.1} parent=5 // pred_check_branch
        %120 = sbr.rel (%p117) target = $region12
      $region11: #{tpu_custom_call.1} parent=5 // pred_region
        %s121 = ssub.s32 %s13, 1
        // Predicated region
        $region13: #{tpu_custom_call.1} parent=11 // pred_check
          %p122 = pneg %p60
        $region14: #{tpu_custom_call.1} parent=11 // pred_check_branch
          %124 = sbr.rel (%p122) target = $region16
        $region15: #{tpu_custom_call.1} parent=11 // pred_region
          _
        $region16: #{tpu_custom_call.1} parent=11 // pred_fallthru
          _
        // Predicated region
        $region17: #{tpu_custom_call.1} parent=11 // pred_check
          %p125 = pneg %p81
        $region18: #{tpu_custom_call.1} parent=11 // pred_check_branch
          %127 = sbr.rel (%p125) target = $region20
        $region19: #{tpu_custom_call.1} parent=11 // pred_region
          _
        $region20: #{tpu_custom_call.1} parent=11 // pred_fallthru
          _
      $region12: #{tpu_custom_call.1} parent=5 // pred_fallthru
        _
      %p128 = scmp.lt.s32.totalorder %s13, 2
      // Predicated region
      $region21: #{tpu_custom_call.1} parent=5 // pred_check
        %p129 = pneg %p128
      $region22: #{tpu_custom_call.1} parent=5 // pred_check_branch
        %131 = sbr.rel (%p129) target = $region24
      $region23: #{tpu_custom_call.1} parent=5 // pred_region
        // Predicated region
        $region25: #{tpu_custom_call.1} parent=23 // pred_check
          %p132 = pneg %p33
        $region26: #{tpu_custom_call.1} parent=23 // pred_check_branch
          %134 = sbr.rel (%p132) target = $region28
        $region27: #{tpu_custom_call.1} parent=23 // pred_region
          %p135 = scmp.lt.s32.totalorder %s13, 1
          %s136 = scalar_select %p135, %s13, 1
          %s137 = smul.addr %s136, 16
          %s138 = smul.addr %s137, 8
          %s139 = scalar_lea.vmem %s0, %s138
        $region28: #{tpu_custom_call.1} parent=23 // pred_fallthru
          _
      $region24: #{tpu_custom_call.1} parent=5 // pred_fallthru
        _
      %p140 = scmp.le.s32.totalorder 1, %s13
      %p141 = scmp.lt.s32.totalorder %s13, 3
      %p142 = pnand %p140, %p141
      %p143 = pneg %p142
      // Predicated region
      $region29: #{tpu_custom_call.1} parent=5 // pred_check
        _
      $region30: #{tpu_custom_call.1} parent=5 // pred_check_branch
        %145 = sbr.rel (%p142) target = $region32
      $region31: #{tpu_custom_call.1} parent=5 // pred_region
        %s146 = ssub.s32 %s13, 1
        %p147 = scmp.lt.s32.totalorder %s18, 1
        %s148 = scalar_select %p147, %s18, 1
        %s149 = smul.addr %s148, 16
        %s150 = smul.addr %s149, 8
        %s151 = scalar_lea.vmem %s0, %s150
        %p152 = pneg %p39
        %p153 = pneg %p36
        %p154 = pneg %p60
        %p155 = pneg %p57
        %p156 = pneg %p81
        %p157 = pneg %p78
        %p158 = pneg %p107
        %p159 = pneg %p104
        %s160 = sand.u32 %s94, 1
        %s161 = scalar_lea.sflag [#allocation4], %s160
        %s162 = sand.u32 %s94, 1
        %s163 = scalar_lea.vmem [#allocation3], %s162
        %p164 = scmp.lt.s32.totalorder %s18, 1
        %s165 = scalar_select %p164, %s18, 1
        %s166 = smul.addr %s165, 16
        %s167 = smul.addr %s166, 8
        %s168 = scalar_lea.vmem %s0, %s167
        %v169 = vld [vmem:[%s168] sm:$0xff]
        %v170 = vld [vmem:[%s168 + $0x8] sm:$0xff]
        %v171 = vld [vmem:[%s168 + $0x10] sm:$0xff]
        %v172 = vld [vmem:[%s168 + $0x18] sm:$0xff]
        %v173 = vld [vmem:[%s168 + $0x20] sm:$0xff]
        %v174 = vld [vmem:[%s168 + $0x28] sm:$0xff]
        %v175 = vld [vmem:[%s168 + $0x30] sm:$0xff]
        %v176 = vld [vmem:[%s168 + $0x38] sm:$0xff]
        %v177 = vld [vmem:[%s168 + $0x40] sm:$0xff]
        %v178 = vld [vmem:[%s168 + $0x48] sm:$0xff]
        %v179 = vld [vmem:[%s168 + $0x50] sm:$0xff]
        %v180 = vld [vmem:[%s168 + $0x58] sm:$0xff]
        %v181 = vld [vmem:[%s168 + $0x60] sm:$0xff]
        %v182 = vld [vmem:[%s168 + $0x68] sm:$0xff]
        %v183 = vld [vmem:[%s168 + $0x70] sm:$0xff]
        %v184 = vld [vmem:[%s168 + $0x78] sm:$0xff]
        %v185 = vld [vmem:[%s1] sm:$0x1]
        %s186 = sld [smem:[#allocation2]]
        %v188 = vlaneseq
        %v189 = vshrl.u32 %v188, 7
        %v190 = vsub.s32 0, %v189
        %v191 = vrot.slane %v185, %v190
        %v193 = vmul.f32 %v169, %v191
        %v194 = vmul.f32 %v170, %v191
        %v195 = vmul.f32 %v171, %v191
        %v196 = vmul.f32 %v172, %v191
        %v197 = vmul.f32 %v173, %v191
        %v198 = vmul.f32 %v174, %v191
        %v199 = vmul.f32 %v175, %v191
        %v200 = vmul.f32 %v176, %v191
        %v201 = vmul.f32 %v177, %v191
        %v202 = vmul.f32 %v178, %v191
        %v203 = vmul.f32 %v179, %v191
        %v204 = vmul.f32 %v180, %v191
        %v205 = vmul.f32 %v181, %v191
        %v206 = vmul.f32 %v182, %v191
        %v207 = vmul.f32 %v183, %v191
        %v208 = vmul.f32 %v184, %v191
        %vm209 = vcmask 261120
        %v210 = vsel %vm209, %v193, 0.0
        %211 = vadd.xlane.f32.xlu0 %v210
        %v212 = vpop.xlane.xlu0 %211
        %v213 = vsel %vm209, %v194, 0.0
        %214 = vadd.xlane.f32.xlu0 %v213
        %v215 = vpop.xlane.xlu0 %214
        %v216 = vsel %vm209, %v195, 0.0
        %217 = vadd.xlane.f32.xlu0 %v216
        %v218 = vpop.xlane.xlu0 %217
        %v219 = vsel %vm209, %v196, 0.0
        %220 = vadd.xlane.f32.xlu0 %v219
        %v221 = vpop.xlane.xlu0 %220
        %v222 = vsel %vm209, %v197, 0.0
        %223 = vadd.xlane.f32.xlu0 %v222
        %v224 = vpop.xlane.xlu0 %223
        %v225 = vsel %vm209, %v198, 0.0
        %226 = vadd.xlane.f32.xlu0 %v225
        %v227 = vpop.xlane.xlu0 %226
        %v228 = vsel %vm209, %v199, 0.0
        %229 = vadd.xlane.f32.xlu0 %v228
        %v230 = vpop.xlane.xlu0 %229
        %v231 = vsel %vm209, %v200, 0.0
        %232 = vadd.xlane.f32.xlu0 %v231
        %v233 = vpop.xlane.xlu0 %232
        %v234 = vsel %vm209, %v201, 0.0
        %235 = vadd.xlane.f32.xlu0 %v234
        %v236 = vpop.xlane.xlu0 %235
        %v237 = vsel %vm209, %v202, 0.0
        %238 = vadd.xlane.f32.xlu0 %v237
        %v239 = vpop.xlane.xlu0 %238
        %v240 = vsel %vm209, %v203, 0.0
        %241 = vadd.xlane.f32.xlu0 %v240
        %v242 = vpop.xlane.xlu0 %241
        %v243 = vsel %vm209, %v204, 0.0
        %244 = vadd.xlane.f32.xlu0 %v243
        %v245 = vpop.xlane.xlu0 %244
        %v246 = vsel %vm209, %v205, 0.0
        %247 = vadd.xlane.f32.xlu0 %v246
        %v248 = vpop.xlane.xlu0 %247
        %v249 = vsel %vm209, %v206, 0.0
        %250 = vadd.xlane.f32.xlu0 %v249
        %v251 = vpop.xlane.xlu0 %250
        %v252 = vsel %vm209, %v207, 0.0
        %253 = vadd.xlane.f32.xlu0 %v252
        %v254 = vpop.xlane.xlu0 %253
        %v255 = vsel %vm209, %v208, 0.0
        %256 = vadd.xlane.f32.xlu0 %v255
        %v257 = vpop.xlane.xlu0 %256
        %v258 = vstv %s186
        %v259 = vadd.f32 %v212, %v258
        %v260 = vadd.f32 %v215, %v258
        %v261 = vadd.f32 %v218, %v258
        %v262 = vadd.f32 %v221, %v258
        %v263 = vadd.f32 %v224, %v258
        %v264 = vadd.f32 %v227, %v258
        %v265 = vadd.f32 %v230, %v258
        %v266 = vadd.f32 %v233, %v258
        %v267 = vadd.f32 %v236, %v258
        %v268 = vadd.f32 %v239, %v258
        %v269 = vadd.f32 %v242, %v258
        %v270 = vadd.f32 %v245, %v258
        %v271 = vadd.f32 %v248, %v258
        %v272 = vadd.f32 %v251, %v258
        %v273 = vadd.f32 %v254, %v258
        %v274 = vadd.f32 %v257, %v258
        %v275 = vxor.u32 %v259, 2147483648
        %v276 = vxor.u32 %v260, 2147483648
        %v277 = vxor.u32 %v261, 2147483648
        %v278 = vxor.u32 %v262, 2147483648
        %v279 = vxor.u32 %v263, 2147483648
        %v280 = vxor.u32 %v264, 2147483648
        %v281 = vxor.u32 %v265, 2147483648
        %v282 = vxor.u32 %v266, 2147483648
        %v283 = vxor.u32 %v267, 2147483648
        %v284 = vxor.u32 %v268, 2147483648
        %v285 = vxor.u32 %v269, 2147483648
        %v286 = vxor.u32 %v270, 2147483648
        %v287 = vxor.u32 %v271, 2147483648
        %v288 = vxor.u32 %v272, 2147483648
        %v289 = vxor.u32 %v273, 2147483648
        %v290 = vxor.u32 %v274, 2147483648
        %v291 = vmul.f32 %v275, 1.442695
        %v292 = vpow.pop %v291
        %v293 = vmul.f32 %v276, 1.442695
        %v294 = vpow.pop %v293
        %v295 = vmul.f32 %v277, 1.442695
        %v296 = vpow.pop %v295
        %v297 = vmul.f32 %v278, 1.442695
        %v298 = vpow.pop %v297
        %v299 = vmul.f32 %v279, 1.442695
        %v300 = vpow.pop %v299
        %v301 = vmul.f32 %v280, 1.442695
        %v302 = vpow.pop %v301
        %v303 = vmul.f32 %v281, 1.442695
        %v304 = vpow.pop %v303
        %v305 = vmul.f32 %v282, 1.442695
        %v306 = vpow.pop %v305
        %v307 = vmul.f32 %v283, 1.442695
        %v308 = vpow.pop %v307
        %v309 = vmul.f32 %v284, 1.442695
        %v310 = vpow.pop %v309
        %v311 = vmul.f32 %v285, 1.442695
        %v312 = vpow.pop %v311
        %v313 = vmul.f32 %v286, 1.442695
        %v314 = vpow.pop %v313
        %v315 = vmul.f32 %v287, 1.442695
        %v316 = vpow.pop %v315
        %v317 = vmul.f32 %v288, 1.442695
        %v318 = vpow.pop %v317
        %v319 = vmul.f32 %v289, 1.442695
        %v320 = vpow.pop %v319
        %v321 = vmul.f32 %v290, 1.442695
        %v322 = vpow.pop %v321
        %v323 = vadd.f32 %v292, 1.0
        %v324 = vadd.f32 %v294, 1.0
        %v325 = vadd.f32 %v296, 1.0
        %v326 = vadd.f32 %v298, 1.0
        %v327 = vadd.f32 %v300, 1.0
        %v328 = vadd.f32 %v302, 1.0
        %v329 = vadd.f32 %v304, 1.0
        %v330 = vadd.f32 %v306, 1.0
        %v331 = vadd.f32 %v308, 1.0
        %v332 = vadd.f32 %v310, 1.0
        %v333 = vadd.f32 %v312, 1.0
        %v334 = vadd.f32 %v314, 1.0
        %v335 = vadd.f32 %v316, 1.0
        %v336 = vadd.f32 %v318, 1.0
        %v337 = vadd.f32 %v320, 1.0
        %v338 = vadd.f32 %v322, 1.0
        %v339 = vrcp.pop %v323
        %v340 = vmul.f32 1.0, %v339
        %v341 = vrcp.pop %v324
        %v342 = vmul.f32 1.0, %v341
        %v343 = vrcp.pop %v325
        %v344 = vmul.f32 1.0, %v343
        %v345 = vrcp.pop %v326
        %v346 = vmul.f32 1.0, %v345
        %v347 = vrcp.pop %v327
        %v348 = vmul.f32 1.0, %v347
        %v349 = vrcp.pop %v328
        %v350 = vmul.f32 1.0, %v349
        %v351 = vrcp.pop %v329
        %v352 = vmul.f32 1.0, %v351
        %v353 = vrcp.pop %v330
        %v354 = vmul.f32 1.0, %v353
        %v355 = vrcp.pop %v331
        %v356 = vmul.f32 1.0, %v355
        %v357 = vrcp.pop %v332
        %v358 = vmul.f32 1.0, %v357
        %v359 = vrcp.pop %v333
        %v360 = vmul.f32 1.0, %v359
        %v361 = vrcp.pop %v334
        %v362 = vmul.f32 1.0, %v361
        %v363 = vrcp.pop %v335
        %v364 = vmul.f32 1.0, %v363
        %v365 = vrcp.pop %v336
        %v366 = vmul.f32 1.0, %v365
        %v367 = vrcp.pop %v337
        %v368 = vmul.f32 1.0, %v367
        %v369 = vrcp.pop %v338
        %v370 = vmul.f32 1.0, %v369
        %v387 = vlaneseq
        %v388 = vand.u32 %v387, 127
        %v389 = vlaneseq
        %v390 = vshrl.u32 %v389, 7
        %v391 = vsub.s32 %v388, %v390
        %v392 = vrot.slane %v340, %v391
        %v393 = vadd.s32 %v388, 4294967288
        %v394 = vlaneseq
        %v395 = vshrl.u32 %v394, 7
        %v396 = vsub.s32 %v393, %v395
        %v397 = vrot.slane %v342, %v396
        %vm398 = vcmask 130112
        %v399 = vsel %vm398, %v397, %v392
        %v400 = vadd.s32 %v388, 4294967280
        %v401 = vlaneseq
        %v402 = vshrl.u32 %v401, 7
        %v403 = vsub.s32 %v400, %v402
        %v404 = vrot.slane %v344, %v403
        %vm405 = vcmask 195712
        %v406 = vsel %vm405, %v404, %v399
        %v407 = vadd.s32 %v388, 4294967272
        %v408 = vlaneseq
        %v409 = vshrl.u32 %v408, 7
        %v410 = vsub.s32 %v407, %v409
        %v411 = vrot.slane %v346, %v410
        %vm412 = vcmask 261312
        %v413 = vsel %vm412, %v411, %v406
        %v414 = vadd.s32 %v388, 4294967264
        %v415 = vlaneseq
        %v416 = vshrl.u32 %v415, 7
        %v417 = vsub.s32 %v414, %v416
        %v418 = vrot.slane %v348, %v417
        %vm419 = vcmask 326912
        %v420 = vsel %vm419, %v418, %v413
        %v421 = vadd.s32 %v388, 4294967256
        %v422 = vlaneseq
        %v423 = vshrl.u32 %v422, 7
        %v424 = vsub.s32 %v421, %v423
        %v425 = vrot.slane %v350, %v424
        %vm426 = vcmask 392512
        %v427 = vsel %vm426, %v425, %v420
        %v428 = vadd.s32 %v388, 4294967248
        %v429 = vlaneseq
        %v430 = vshrl.u32 %v429, 7
        %v431 = vsub.s32 %v428, %v430
        %v432 = vrot.slane %v352, %v431
        %vm433 = vcmask 458112
        %v434 = vsel %vm433, %v432, %v427
        %v435 = vadd.s32 %v388, 4294967240
        %v436 = vlaneseq
        %v437 = vshrl.u32 %v436, 7
        %v438 = vsub.s32 %v435, %v437
        %v439 = vrot.slane %v354, %v438
        %vm440 = vcmask 523712
        %v441 = vsel %vm440, %v439, %v434
        %v442 = vadd.s32 %v388, 4294967232
        %v443 = vlaneseq
        %v444 = vshrl.u32 %v443, 7
        %v445 = vsub.s32 %v442, %v444
        %v446 = vrot.slane %v356, %v445
        %vm447 = vcmask 589312
        %v448 = vsel %vm447, %v446, %v441
        %v449 = vadd.s32 %v388, 4294967224
        %v450 = vlaneseq
        %v451 = vshrl.u32 %v450, 7
        %v452 = vsub.s32 %v449, %v451
        %v453 = vrot.slane %v358, %v452
        %vm454 = vcmask 654912
        %v455 = vsel %vm454, %v453, %v448
        %v456 = vadd.s32 %v388, 4294967216
        %v457 = vlaneseq
        %v458 = vshrl.u32 %v457, 7
        %v459 = vsub.s32 %v456, %v458
        %v460 = vrot.slane %v360, %v459
        %vm461 = vcmask 720512
        %v462 = vsel %vm461, %v460, %v455
        %v463 = vadd.s32 %v388, 4294967208
        %v464 = vlaneseq
        %v465 = vshrl.u32 %v464, 7
        %v466 = vsub.s32 %v463, %v465
        %v467 = vrot.slane %v362, %v466
        %vm468 = vcmask 786112
        %v469 = vsel %vm468, %v467, %v462
        %v470 = vadd.s32 %v388, 4294967200
        %v471 = vlaneseq
        %v472 = vshrl.u32 %v471, 7
        %v473 = vsub.s32 %v470, %v472
        %v474 = vrot.slane %v364, %v473
        %vm475 = vcmask 851712
        %v476 = vsel %vm475, %v474, %v469
        %v477 = vadd.s32 %v388, 4294967192
        %v478 = vlaneseq
        %v479 = vshrl.u32 %v478, 7
        %v480 = vsub.s32 %v477, %v479
        %v481 = vrot.slane %v366, %v480
        %vm482 = vcmask 917312
        %v483 = vsel %vm482, %v481, %v476
        %v484 = vadd.s32 %v388, 4294967184
        %v485 = vlaneseq
        %v486 = vshrl.u32 %v485, 7
        %v487 = vsub.s32 %v484, %v486
        %v488 = vrot.slane %v368, %v487
        %vm489 = vcmask 982912
        %v490 = vsel %vm489, %v488, %v483
        %v491 = vadd.s32 %v388, 4294967176
        %v492 = vlaneseq
        %v493 = vshrl.u32 %v492, 7
        %v494 = vsub.s32 %v491, %v493
        %v495 = vrot.slane %v370, %v494
        %vm496 = vcmask 1048512
        %v497 = vsel %vm496, %v495, %v490
        %499 = vst [vmem:[%s163] sm:$0x1] %v497
        %s500 = sand.u32 %s94, 1
        %s501 = scalar_lea.sflag [#allocation4], %s500
        %s502 = sand.u32 %s94, 1
        %s503 = scalar_lea.vmem [#allocation3], %s502
        // Predicated region
        $region33: #{tpu_custom_call.1} parent=31 // pred_check
          %p504 = pneg %p104
        $region34: #{tpu_custom_call.1} parent=31 // pred_check_branch
          %506 = sbr.rel (%p504) target = $region36
        $region35: #{tpu_custom_call.1} parent=31 // pred_region
          %s508 = ssub.s32 16, 16
          %509 = vsyncadd %s501, %s508
          %s510 = smul.addr %s18, 16
          %s511 = scalar_lea.hbm %s3, %s510
          %s513 = sshll.u32 %s503, 4
          %s514 = int_to_ptr.vmem [resolvable:$true] %s513
          %516 = dma.vmem_to_hbm [thread:$0]  %s514, 16, %s511, %s501
        $region36: #{tpu_custom_call.1} parent=31 // pred_fallthru
          _
      $region32: #{tpu_custom_call.1} parent=5 // pred_fallthru
        _
      %p517 = scmp.le.s32.totalorder 2, %s13
      // Predicated region
      $region37: #{tpu_custom_call.1} parent=5 // pred_check
        %p518 = pneg %p517
      $region38: #{tpu_custom_call.1} parent=5 // pred_check_branch
        %520 = sbr.rel (%p518) target = $region40
      $region39: #{tpu_custom_call.1} parent=5 // pred_region
        %s521 = ssub.s32 %s13, 2
        // Predicated region
        $region41: #{tpu_custom_call.1} parent=39 // pred_check
          %p522 = pneg %p110
        $region42: #{tpu_custom_call.1} parent=39 // pred_check_branch
          %524 = sbr.rel (%p522) target = $region44
        $region43: #{tpu_custom_call.1} parent=39 // pred_region
          %s525 = sand.u32 %s95, 1
          %s526 = scalar_lea.sflag [#allocation4], %s525
          %s527 = sand.u32 %s95, 1
          %s528 = scalar_lea.vmem [#allocation3], %s527
          %529 = dma.done %s526, 16
        $region44: #{tpu_custom_call.1} parent=39 // pred_fallthru
          _
      $region40: #{tpu_custom_call.1} parent=5 // pred_fallthru
        _
    $region6: #{tpu_custom_call.1} parent=1 // loop_footer
      %s17 = sadd.s32 1, %s13
    $region7: #{tpu_custom_call.1} parent=1 // loop_footer_branch
      %12 = sbr.rel target = $region3
    $region8: #{tpu_custom_call.1} parent=1 // loop_exit
      _
    %530 = vsyncpa [#allocation4], 1
    %s531 = scalar_lea.sflag [#allocation4], 1
    %532 = vsyncpa %s531, 1

</llo_original>
